<compile_context>
chip_gen: v5e
topology: v5e:2x2
jax: 0.10.0
libtpu: 0.0.40
codegen_flags: <defaults>
</compile_context>

<pallas_src>
import functools

import jax
import jax.numpy as jnp
from jax.experimental import pallas as pl
from jax.experimental.pallas import tpu as pltpu

_LANES = 128
_SUBLANES = 8
_MAX_TILE_ROWS = 2048  # 2048 x 128 x 4 B = 1 MiB per input block (4 MiB w/ dbl-buf x 2 inputs)


def _relative_error_kernel(y_ref, s_ref, out_ref, acc_ref, *,
                           eps, inv_n, n_elems, tile_rows, needs_mask):
    """One grid step: accumulate sum of |s - y| / |y + eps| into a (8,128) vreg."""
    step = pl.program_id(0)

    @pl.when(step == 0)
    def _():
        acc_ref[...] = jnp.zeros_like(acc_ref)

    y = y_ref[...].astype(jnp.float32)
    s = s_ref[...].astype(jnp.float32)
    err = jnp.abs(s - y) * pl.reciprocal(jnp.abs(y + eps), approx=False)

    if needs_mask:
        # Mask out padded / out-of-bounds elements of the (possibly partial)
        # last tile using the global linear element index.
        row = jax.lax.broadcasted_iota(jnp.int32, (tile_rows, _LANES), 0)
        lane = jax.lax.broadcasted_iota(jnp.int32, (tile_rows, _LANES), 1)
        lin = (step * tile_rows + row) * _LANES + lane
        err = jnp.where(lin < n_elems, err, 0.0)

    # Accumulate into a single vreg-shaped (8, 128) accumulator: the reduce over
    # axis 0 is just (tile_rows // 8) elementwise vreg adds on the VPU.
    acc_ref[...] += err.reshape(tile_rows // _SUBLANES, _SUBLANES, _LANES).sum(axis=0)

    @pl.when(step == pl.num_programs(0) - 1)
    def _():
        out_ref[0, 0] = jnp.sum(acc_ref[...]) * inv_n


def relative_error(y_true, samples, eps=1e-6):
    """Pallas TPU equivalent of RelativeError.forward (returns an f32 scalar)."""
    assert y_true.shape == samples.shape
    n_elems = int(y_true.size)

    # Stream at native dtype; the kernel casts to f32 in VMEM.
    y_flat = jnp.ravel(y_true)
    s_flat = jnp.ravel(samples)

    # Only pad when the flat length is not a multiple of 8*128 (pad values are
    # masked inside the kernel, so the value does not matter).
    chunk = _SUBLANES * _LANES
    padded_len = ((n_elems + chunk - 1) // chunk) * chunk
    if padded_len != n_elems:
        pad = padded_len - n_elems
        y_flat = jnp.pad(y_flat, (0, pad))
        s_flat = jnp.pad(s_flat, (0, pad))

    rows = padded_len // _LANES          # always a multiple of 8
    tile_rows = min(_MAX_TILE_ROWS, rows)
    grid_steps = -(-rows // tile_rows)   # ceil-div; last tile may be partial
    needs_mask = (padded_len != n_elems) or (rows % tile_rows != 0)

    y2d = y_flat.reshape(rows, _LANES)
    s2d = s_flat.reshape(rows, _LANES)

    kernel = functools.partial(
        _relative_error_kernel,
        eps=float(eps),                 # Python scalars -> baked literals, no captured consts
        inv_n=1.0 / float(n_elems),
        n_elems=n_elems,
        tile_rows=tile_rows,
        needs_mask=needs_mask,
    )

    out = pl.pallas_call(
        kernel,
        out_shape=jax.ShapeDtypeStruct((1, 1), jnp.float32),
        grid_spec=pltpu.PrefetchScalarGridSpec(
            num_scalar_prefetch=0,
            grid=(grid_steps,),
            in_specs=[
                pl.BlockSpec((tile_rows, _LANES), lambda i: (i, 0)),
                pl.BlockSpec((tile_rows, _LANES), lambda i: (i, 0)),
            ],
            out_specs=pl.BlockSpec(memory_space=pltpu.MemorySpace.SMEM),
            scratch_shapes=[pltpu.VMEM((_SUBLANES, _LANES), jnp.float32)],
        ),
        compiler_params=pltpu.CompilerParams(
            dimension_semantics=("arbitrary",),
        ),
    )(y2d, s2d)

    return out[0, 0]


if __name__ == "__main__":
    key = jax.random.PRNGKey(0)
    k1, k2 = jax.random.split(key)

    # Small NCHW-like shapes consistent with a typical MDN use (y_true vs samples).
    shape = (2, 4, 16, 16)
    y_true = jax.random.normal(k1, shape, dtype=jnp.float32) + 2.0
    samples = y_true + 0.1 * jax.random.normal(k2, shape, dtype=jnp.float32)

    result = relative_error(y_true, samples)
    result = jax.block_until_ready(result)

    # Reference check in plain JAX (same semantics as the numpy expression).
    ref = jnp.mean(jnp.abs(samples - y_true) / jnp.abs(y_true + 1e-6))
    assert jnp.allclose(result, ref, rtol=1e-5, atol=1e-6), (result, ref)

    print("KERNEL_OK")
</pallas_src>

<mosaic_0001>
module attributes {stable_mosaic.version = 11 : i64} {
  func.func @_relative_error_kernel(%arg0: i32, %arg1: memref<16x128xf32, #tpu.memory_space<vmem>>, %arg2: memref<16x128xf32, #tpu.memory_space<vmem>>, %arg3: memref<1x1xf32, #tpu.memory_space<smem>>, %arg4: memref<8x128xf32, #tpu.memory_space<vmem>>) attributes {dimension_semantics = [#tpu.dimension_semantics<arbitrary>], iteration_bounds = array<i64: 1>, scalar_prefetch = 0 : i64, scratch_operands = 1 : i64, tpu.core_type = #tpu.core_type<tc>, window_params = [{transform_indices = @transform_0, window_bounds = array<i64: 16, 128>}, {transform_indices = @transform_1, window_bounds = array<i64: 16, 128>}, {transform_indices = @transform_2, window_bounds = array<i64: 1, 1>}]} {
    %c0_i32 = arith.constant 0 : i32
    %0 = arith.cmpi eq, %arg0, %c0_i32 : i32
    %1 = arith.extui %0 : i1 to i32
    %c0_i32_0 = arith.constant 0 : i32
    %2 = arith.cmpi ne, %1, %c0_i32_0 : i32
    scf.if %2 {
      %cst_11 = arith.constant 0.000000e+00 : f32
      %20 = vector.broadcast %cst_11 : f32 to vector<8x128xf32>
      %c0_12 = arith.constant 0 : index
      %c0_13 = arith.constant 0 : index
      %21 = vector.load %arg4[%c0_12, %c0_13] : memref<8x128xf32, #tpu.memory_space<vmem>>, vector<8x128xf32>
      tpu.vector_store %arg4[%c0_12, %c0_13], %20 {strides = array<i32>} : memref<8x128xf32, #tpu.memory_space<vmem>>, vector<8x128xf32>,
    } else {
    }
    %c0 = arith.constant 0 : index
    %c0_1 = arith.constant 0 : index
    %3 = vector.load %arg1[%c0, %c0_1] : memref<16x128xf32, #tpu.memory_space<vmem>>, vector<16x128xf32>
    %c0_2 = arith.constant 0 : index
    %c0_3 = arith.constant 0 : index
    %4 = vector.load %arg2[%c0_2, %c0_3] : memref<16x128xf32, #tpu.memory_space<vmem>>, vector<16x128xf32>
    %5 = arith.subf %4, %3 : vector<16x128xf32>
    %6 = math.absf %5 : vector<16x128xf32>
    %cst = arith.constant 9.99999997E-7 : f32
    %7 = vector.broadcast %cst : f32 to vector<16x128xf32>
    %8 = arith.addf %3, %7 : vector<16x128xf32>
    %9 = math.absf %8 : vector<16x128xf32>
    %10 = tpu.reciprocal %9 : vector<16x128xf32> -> vector<16x128xf32>
    %11 = arith.mulf %6, %10 : vector<16x128xf32>
    %c0_4 = arith.constant 0 : index
    %c0_5 = arith.constant 0 : index
    %12 = vector.load %arg4[%c0_4, %c0_5] : memref<8x128xf32, #tpu.memory_space<vmem>>, vector<8x128xf32>
    %13 = vector.shape_cast %11 : vector<16x128xf32> to vector<2x8x128xf32>
    %cst_6 = arith.constant dense<0.000000e+00> : vector<8x128xf32>
    %14 = vector.multi_reduction <add>, %13, %cst_6 [0] : vector<2x8x128xf32> to vector<8x128xf32>
    %15 = arith.addf %12, %14 : vector<8x128xf32>
    %c0_7 = arith.constant 0 : index
    %c0_8 = arith.constant 0 : index
    %16 = vector.load %arg4[%c0_7, %c0_8] : memref<8x128xf32, #tpu.memory_space<vmem>>, vector<8x128xf32>
    tpu.vector_store %arg4[%c0_7, %c0_8], %15 {strides = array<i32>} : memref<8x128xf32, #tpu.memory_space<vmem>>, vector<8x128xf32>,
    %c0_i32_9 = arith.constant 0 : i32
    %17 = arith.cmpi eq, %arg0, %c0_i32_9 : i32
    %18 = arith.extui %17 : i1 to i32
    %c0_i32_10 = arith.constant 0 : i32
    %19 = arith.cmpi ne, %18, %c0_i32_10 : i32
    scf.if %19 {
      %c0_11 = arith.constant 0 : index
      %c0_12 = arith.constant 0 : index
      %20 = vector.load %arg4[%c0_11, %c0_12] : memref<8x128xf32, #tpu.memory_space<vmem>>, vector<8x128xf32>
      %21 = vector.shape_cast %20 : vector<8x128xf32> to vector<1x8x128xf32>
      %cst_13 = arith.constant dense<0.000000e+00> : vector<1xf32>
      %22 = vector.multi_reduction <add>, %21, %cst_13 [1, 2] : vector<1x8x128xf32> to vector<1xf32>
      %23 = vector.shape_cast %22 : vector<1xf32> to vector<1x1x1xf32>
      %24 = vector.extract %23[0, 0, 0] : f32 from vector<1x1x1xf32>
      %cst_14 = arith.constant 4.8828125E-4 : f32
      %25 = arith.mulf %24, %cst_14 : f32
      %c0_15 = arith.constant 0 : index
      %c0_16 = arith.constant 0 : index
      %26 = memref.load %arg3[%c0_15, %c0_16] : memref<1x1xf32, #tpu.memory_space<smem>>
      memref.store %25, %arg3[%c0_15, %c0_16] : memref<1x1xf32, #tpu.memory_space<smem>>
    } else {
    }
    return
  }
  func.func @transform_0(%arg0: i32) -> (i32, i32) {
    %c0_i32 = arith.constant 0 : i32
    %c0_i32_0 = arith.constant 0 : i32
    return %arg0, %c0_i32 : i32, i32
  }
  func.func @transform_1(%arg0: i32) -> (i32, i32) {
    %c0_i32 = arith.constant 0 : i32
    %c0_i32_0 = arith.constant 0 : i32
    return %arg0, %c0_i32 : i32, i32
  }
  func.func @transform_2(%arg0: i32) -> (i32, i32) {
    %c0_i32 = arith.constant 0 : i32
    %c0_i32_0 = arith.constant 0 : i32
    %c0_i32_1 = arith.constant 0 : i32
    return %c0_i32, %c0_i32_0 : i32, i32
  }
}

</mosaic_0001>

<llo_original>
// kernel: tpu_custom_call.1
$region0: #{tpu_custom_call.1}
  #allocation0 [shape = 'u32[]', space=smem, size = 0x4, offset = 0x4, fixed_abs, tag = 'smem constant byte address 0x4 - core index']
  #allocation1 [shape = 'u32[72,128]{1,0:T(1,128)}', space=vmem, size = 0x9000, scoped, tag = 'internal scratch']
  #allocation2 [shape = 'f32[8,128]{1,0:T(8,128)}', space=vmem, size = 0x1000, scoped, tag = 'scratch operand']
  %s0 = inlined_call_operand.hbm [shape: f32[16,128], index: 0, kind: input, shape index: {}]
  %s1 = inlined_call_operand.hbm [shape: f32[16,128], index: 1, kind: input, shape index: {}]
  %s2 = inlined_call_operand.hbm [shape: f32[1,1], index: 2, kind: output, shape index: {}]
  %s3 = sld [smem:[#allocation0]]
  $region34: #{tpu_custom_call.1} parent=0
    _
  %s5 = ssub.s32 1, %s3
  %s6 = scalar_select 0, %s5, %s3
  $region1: #{tpu_custom_call.1} parent=0
    #allocation3 [shape = 'u8[8192]{0}', space=vmem, size = 0x2000, scoped, tag = 'input window, operand 0, single buffered']
    #allocation4 [shape = 's32[1]{0}', space=sflag, size = 0x4, scoped, tag = 'scoped memory for tpu_custom_call.1']
    #allocation5 [shape = 's32[1]{0}', space=sflag, size = 0x4, scoped, tag = 'scoped memory for tpu_custom_call.1']
    #allocation6 [shape = 'u8[8192]{0}', space=vmem, size = 0x2000, scoped, tag = 'input window, operand 1, single buffered']
    #allocation7 [shape = 's32[1]{0}', space=sflag, size = 0x4, scoped, tag = 'scoped memory for tpu_custom_call.1']
    #allocation8 [shape = 'u8[512]{0}', space=smem, size = 0x200, scoped, tag = 'output window, operand 0, single buffered']
    %7 = vsyncpa [#allocation4], 0
    %8 = vsyncpa [#allocation7], 0
    %9 = vsyncpa [#allocation5], 0
    // Predicated region
    $region2: #{tpu_custom_call.1} parent=1 // pred_check
      _
    $region3: #{tpu_custom_call.1} parent=1 // pred_check_branch
      %11 = sbr.rel (0) target = $region5
    $region4: #{tpu_custom_call.1} parent=1 // pred_region
      %13 = vsyncadd [#allocation4], 0
      %s14 = sshll.u32 %s0, 4
      %s15 = int_to_ptr.hbm [resolvable:$true] %s14
      %s16 = sshll.u32 [#allocation3], 4
      %s17 = int_to_ptr.vmem [resolvable:$true] %s16
      %22 = dma.hbm_to_vmem [thread:$0]  %s15, 256, %s17, [#allocation4], 128, 128, 8
    $region5: #{tpu_custom_call.1} parent=1 // pred_fallthru
      _
    // Predicated region
    $region6: #{tpu_custom_call.1} parent=1 // pred_check
      _
    $region7: #{tpu_custom_call.1} parent=1 // pred_check_branch
      %24 = sbr.rel (0) target = $region9
    $region8: #{tpu_custom_call.1} parent=1 // pred_region
      %26 = vsyncadd [#allocation7], 0
      %s27 = sshll.u32 %s1, 4
      %s28 = int_to_ptr.hbm [resolvable:$true] %s27
      %s29 = sshll.u32 [#allocation6], 4
      %s30 = int_to_ptr.vmem [resolvable:$true] %s29
      %35 = dma.hbm_to_vmem [thread:$0]  %s28, 256, %s30, [#allocation7], 128, 128, 8
    $region9: #{tpu_custom_call.1} parent=1 // pred_fallthru
      _
    // Predicated region
    $region10: #{tpu_custom_call.1} parent=1 // pred_check
      _
    $region11: #{tpu_custom_call.1} parent=1 // pred_check_branch
      %37 = sbr.rel (0) target = $region13
    $region12: #{tpu_custom_call.1} parent=1 // pred_region
      %39 = dma.done [#allocation4], 256
    $region13: #{tpu_custom_call.1} parent=1 // pred_fallthru
      _
    // Predicated region
    $region14: #{tpu_custom_call.1} parent=1 // pred_check
      _
    $region15: #{tpu_custom_call.1} parent=1 // pred_check_branch
      %41 = sbr.rel (0) target = $region17
    $region16: #{tpu_custom_call.1} parent=1 // pred_region
      %43 = dma.done [#allocation7], 256
    $region17: #{tpu_custom_call.1} parent=1 // pred_fallthru
      _
    %p44 = scmp.eq.s32.totalorder 0, 0
    // Predicated region
    $region18: #{tpu_custom_call.1} parent=1 // pred_check
      %p45 = pneg %p44
    $region19: #{tpu_custom_call.1} parent=1 // pred_check_branch
      %47 = sbr.rel (%p45) target = $region21
    $region20: #{tpu_custom_call.1} parent=1 // pred_region
      %48 = vst [vmem:[#allocation2] sm:$0xff] 0.0
    $region21: #{tpu_custom_call.1} parent=1 // pred_fallthru
      _
    %v49 = vld [vmem:[#allocation3] sm:$0xff]
    %v50 = vld [vmem:[#allocation3 + $0x8] sm:$0xff]
    %v51 = vld [vmem:[#allocation6] sm:$0xff]
    %v52 = vld [vmem:[#allocation6 + $0x8] sm:$0xff]
    %v53 = vsub.f32 %v51, %v49
    %v54 = vsub.f32 %v52, %v50
    %v55 = vand.u32 2147483647, %v53
    %v56 = vand.u32 2147483647, %v54
    %v57 = vadd.f32 %v49, 1e-06
    %v58 = vadd.f32 %v50, 1e-06
    %v59 = vand.u32 2147483647, %v57
    %v60 = vand.u32 2147483647, %v58
    %v61 = vrcp.pop %v59
    %v62 = vmul.f32 %v59, %v61
    %v63 = vsub.f32 1.0, %v62
    %v64 = vmul.f32 %v61, %v63
    %v65 = vadd.f32 %v61, %v64
    %vm66 = vweird.f32 %v59
    %vm67 = vweird.f32 %v61
    %vm68 = vmor %vm66, %vm67
    %v69 = vsel %vm68, %v61, %v65
    %v70 = vand.u32 2147483647, %v59
    %vm71 = vcmp.eq.f32.partialorder %v70, 8.507059e+37
    %v72 = vand.u32 %v59, 2147483648
    %v73 = vor.u32 1.1754944e-38, %v72
    %v74 = vsel %vm71, %v73, %v69
    %v75 = vrcp.pop %v60
    %v76 = vmul.f32 %v60, %v75
    %v77 = vsub.f32 1.0, %v76
    %v78 = vmul.f32 %v75, %v77
    %v79 = vadd.f32 %v75, %v78
    %vm80 = vweird.f32 %v60
    %vm81 = vweird.f32 %v75
    %vm82 = vmor %vm80, %vm81
    %v83 = vsel %vm82, %v75, %v79
    %v84 = vand.u32 2147483647, %v60
    %vm85 = vcmp.eq.f32.partialorder %v84, 8.507059e+37
    %v86 = vand.u32 %v60, 2147483648
    %v87 = vor.u32 1.1754944e-38, %v86
    %v88 = vsel %vm85, %v87, %v83
    %v89 = vmul.f32 %v55, %v74
    %v90 = vmul.f32 %v56, %v88
    %v91 = vld [vmem:[#allocation2] sm:$0xff]
    %v92 = vadd.f32 %v89, %v90
    %v93 = vadd.f32 %v91, %v92
    %94 = vst [vmem:[#allocation2] sm:$0xff] %v93
    // Predicated region
    $region22: #{tpu_custom_call.1} parent=1 // pred_check
      %p95 = pneg %p44
    $region23: #{tpu_custom_call.1} parent=1 // pred_check_branch
      %97 = sbr.rel (%p95) target = $region25
    $region24: #{tpu_custom_call.1} parent=1 // pred_region
      %v98 = vld [vmem:[#allocation2] sm:$0xff]
      %99 = vadd.xlane.f32.xlu0 %v98
      %v100 = vpop.xlane.xlu0 %99
      %v101 = vrot.slane %v100, 4
      %v102 = vadd.f32 %v100, %v101
      %v103 = vrot.slane %v102, 2
      %v104 = vadd.f32 %v102, %v103
      %v105 = vrot.slane %v104, 1
      %v106 = vadd.f32 %v104, %v105
      %s107 = vtos %v106
      %s108 = smul.f32 %s107, 0.00048828125
      %s109 = scalar_lea.smem [#allocation8], 0
      %110 = sst [smem:[%s109]] %s108
    $region25: #{tpu_custom_call.1} parent=1 // pred_fallthru
      _
    // Predicated region
    $region26: #{tpu_custom_call.1} parent=1 // pred_check
      _
    $region27: #{tpu_custom_call.1} parent=1 // pred_check_branch
      %112 = sbr.rel (0) target = $region29
    $region28: #{tpu_custom_call.1} parent=1 // pred_region
      %114 = vsyncadd [#allocation5], 0
      %s116 = sshll.u32 %s2, 4
      %s117 = int_to_ptr.hbm [resolvable:$true] %s116
      %119 = dma.smem_to_hbm [#allocation8], 16, %s117, [#allocation5]
    $region29: #{tpu_custom_call.1} parent=1 // pred_fallthru
      _
    // Predicated region
    $region30: #{tpu_custom_call.1} parent=1 // pred_check
      _
    $region31: #{tpu_custom_call.1} parent=1 // pred_check_branch
      %121 = sbr.rel (0) target = $region33
    $region32: #{tpu_custom_call.1} parent=1 // pred_region
      %123 = dma.done [#allocation5], 16
    $region33: #{tpu_custom_call.1} parent=1 // pred_fallthru
      _
    %124 = sfence
    %125 = vsyncpa [#allocation4], 1
    %126 = vsyncpa [#allocation7], 1
    %127 = vsyncpa [#allocation5], 1

</llo_original>
